<compile_context>
chip_gen: v7x
topology: tpu7x:2x2x1
jax: 0.10.0
libtpu: 0.0.40
codegen_flags: <defaults>
</compile_context>

<pallas_src>
import functools

import jax
import jax.numpy as jnp
from jax.experimental import pallas as pl
from jax.experimental.pallas import tpu as pltpu


def _mlp_kernel(x_ref, w1_ref, b1_ref, w2_ref, b2_ref, w3_ref, b3_ref, o_ref):
    # Fused 3-layer MLP on one (TB, 34) batch tile. Weights are VMEM-resident
    # (constant index_map), activations stream through the auto pipeline.
    x = x_ref[...]                                              # [TB, 34]
    h1 = jnp.dot(x, w1_ref[...],
                 preferred_element_type=jnp.float32) + b1_ref[...]   # [TB, 64] f32
    h1 = jnp.maximum(h1, 0.0)                                   # ReLU
    # Dropout(0.2): identity in eval mode.
    h1 = h1.astype(w2_ref.dtype)
    h2 = jnp.dot(h1, w2_ref[...],
                 preferred_element_type=jnp.float32) + b2_ref[...]   # [TB, 32] f32
    h2 = jnp.maximum(h2, 0.0)                                   # ReLU
    # Dropout(0.2): identity in eval mode.
    h2 = h2.astype(w3_ref.dtype)
    out = jnp.dot(h2, w3_ref[...],
                  preferred_element_type=jnp.float32) + b3_ref[...]  # [TB, 2] f32
    o_ref[...] = out.astype(o_ref.dtype)


def _round_up(n, m):
    return ((n + m - 1) // m) * m


@functools.partial(jax.jit, static_argnames=("compute_dtype", "tile_batch"))
def neural_net_forward(x, w1, b1, w2, b2, w3, b3, *,
                       compute_dtype=jnp.bfloat16, tile_batch=2048):
    # Mirror `if x.dim() == 1: x = x.unsqueeze(0)`
    if x.ndim == 1:
        x = x[None, :]
    B, F = x.shape
    num_classes = w3.shape[1]

    # Cast streaming operands to the compute dtype (bf16 by default); biases
    # stay f32 and are added to the f32 MXU accumulators.
    xc = x.astype(compute_dtype)
    w1c, w2c, w3c = (w.astype(compute_dtype) for w in (w1, w2, w3))
    b1f, b2f, b3f = (b.astype(jnp.float32) for b in (b1, b2, b3))

    # Sublane-aligned batch tile; pad B up to a multiple of TB so every grid
    # step works on a full, unmasked tile (padded rows are sliced off below).
    TB = _round_up(min(B, tile_batch), 8)
    B_pad = _round_up(B, TB)
    if B_pad != B:
        xc = jnp.pad(xc, ((0, B_pad - B), (0, 0)))
    grid = (pl.cdiv(B_pad, TB),)

    tiled = lambda shape: pl.BlockSpec(shape, lambda i: (i, 0))      # streams per tile
    resident = lambda shape: pl.BlockSpec(shape, lambda i: (0, 0))   # constant across grid

    out = pl.pallas_call(
        _mlp_kernel,
        out_shape=jax.ShapeDtypeStruct((B_pad, num_classes), jnp.float32),
        grid=grid,
        in_specs=[
            tiled((TB, F)),
            resident(w1c.shape), resident(b1f.shape),
            resident(w2c.shape), resident(b2f.shape),
            resident(w3c.shape), resident(b3f.shape),
        ],
        out_specs=tiled((TB, num_classes)),
        compiler_params=pltpu.CompilerParams(
            dimension_semantics=("parallel",)),
    )(xc, w1c, b1f, w2c, b2f, w3c, b3f)
    return out[:B]


def init_params(key):
    """Deterministic parameter init (PyTorch-Linear-style uniform bounds).

    Weights stored as (in_features, out_features)."""
    sizes = [(34, 64), (64, 32), (32, 2)]
    params = []
    for fan_in, fan_out in sizes:
        kw, kb, key = jax.random.split(key, 3)
        bound = 1.0 / (fan_in ** 0.5)
        w = jax.random.uniform(kw, (fan_in, fan_out), jnp.float32, -bound, bound)
        b = jax.random.uniform(kb, (1, fan_out), jnp.float32, -bound, bound)
        params += [w, b]
    return params


def _reference_forward(x, w1, b1, w2, b2, w3, b3, compute_dtype=jnp.float32):
    """Plain-jnp reference with the same dtype policy as the kernel."""
    if x.ndim == 1:
        x = x[None, :]
    c = lambda a: a.astype(compute_dtype)
    h1 = jnp.maximum(
        jnp.dot(c(x), c(w1), preferred_element_type=jnp.float32) + b1, 0.0)
    h2 = jnp.maximum(
        jnp.dot(c(h1), c(w2), preferred_element_type=jnp.float32) + b2, 0.0)
    return jnp.dot(c(h2), c(w3), preferred_element_type=jnp.float32) + b3


if __name__ == "__main__":
    key = jax.random.PRNGKey(0)
    kx, kp = jax.random.split(key)

    # Small batch of feature vectors, input_size = 34 as in the module.
    B = 8
    x = jax.random.normal(kx, (B, 34), dtype=jnp.float32)
    params = init_params(kp)

    # f32 path: exact-math check against the reference.
    out_f32 = jax.block_until_ready(
        neural_net_forward(x, *params, compute_dtype=jnp.float32))
    ref_f32 = _reference_forward(x, *params, compute_dtype=jnp.float32)
    assert out_f32.shape == (B, 2), out_f32.shape
    assert jnp.allclose(out_f32, ref_f32, atol=1e-5, rtol=1e-5), \
        "f32 mismatch vs JAX reference"

    # Default bf16-streaming path (f32 accumulation): loose tolerance.
    out_bf16 = jax.block_until_ready(neural_net_forward(x, *params))
    ref_bf16 = _reference_forward(x, *params, compute_dtype=jnp.bfloat16)
    assert out_bf16.shape == (B, 2), out_bf16.shape
    assert jnp.allclose(out_bf16, ref_bf16, atol=2e-2, rtol=2e-2), \
        "bf16 mismatch vs JAX reference"

    # Multi-tile grid + ragged-tail path: B not a multiple of the tile,
    # small tile_batch to force several grid steps.
    B2 = 37
    x2 = jax.random.normal(jax.random.PRNGKey(1), (B2, 34), dtype=jnp.float32)
    out_tiled = jax.block_until_ready(
        neural_net_forward(x2, *params, compute_dtype=jnp.float32,
                           tile_batch=16))
    ref_tiled = _reference_forward(x2, *params, compute_dtype=jnp.float32)
    assert out_tiled.shape == (B2, 2), out_tiled.shape
    assert jnp.allclose(out_tiled, ref_tiled, atol=1e-5, rtol=1e-5), \
        "tiled/tail mismatch vs JAX reference"

    # Also exercise the 1-D input path (unsqueeze semantics).
    out1d = jax.block_until_ready(neural_net_forward(x[0], *params))
    assert out1d.shape == (1, 2), out1d.shape

    print("KERNEL_OK")
</pallas_src>

<mosaic_0001>
module attributes {stable_mosaic.version = 11 : i64} {
  func.func @_mlp_kernel(%arg0: i32, %arg1: memref<8x34xf32, #tpu.memory_space<vmem>>, %arg2: memref<34x64xf32, #tpu.memory_space<vmem>>, %arg3: memref<1x64xf32, #tpu.memory_space<vmem>>, %arg4: memref<64x32xf32, #tpu.memory_space<vmem>>, %arg5: memref<1x32xf32, #tpu.memory_space<vmem>>, %arg6: memref<32x2xf32, #tpu.memory_space<vmem>>, %arg7: memref<1x2xf32, #tpu.memory_space<vmem>>, %arg8: memref<8x2xf32, #tpu.memory_space<vmem>>) attributes {dimension_semantics = [#tpu.dimension_semantics<parallel>], iteration_bounds = array<i64: 1>, scalar_prefetch = 0 : i64, scratch_operands = 0 : i64, tpu.core_type = #tpu.core_type<tc>, window_params = [{transform_indices = @transform_0, window_bounds = array<i64: 8, 34>}, {pipeline_mode = #tpu.pipeline_mode<synchronous>, transform_indices = @transform_1, window_bounds = array<i64: 34, 64>}, {pipeline_mode = #tpu.pipeline_mode<synchronous>, transform_indices = @transform_2, window_bounds = array<i64: 1, 64>}, {pipeline_mode = #tpu.pipeline_mode<synchronous>, transform_indices = @transform_3, window_bounds = array<i64: 64, 32>}, {pipeline_mode = #tpu.pipeline_mode<synchronous>, transform_indices = @transform_4, window_bounds = array<i64: 1, 32>}, {pipeline_mode = #tpu.pipeline_mode<synchronous>, transform_indices = @transform_5, window_bounds = array<i64: 32, 2>}, {pipeline_mode = #tpu.pipeline_mode<synchronous>, transform_indices = @transform_6, window_bounds = array<i64: 1, 2>}, {transform_indices = @transform_7, window_bounds = array<i64: 8, 2>}]} {
    %c0 = arith.constant 0 : index
    %c0_0 = arith.constant 0 : index
    %0 = vector.load %arg1[%c0, %c0_0] : memref<8x34xf32, #tpu.memory_space<vmem>>, vector<8x34xf32>
    %c0_1 = arith.constant 0 : index
    %c0_2 = arith.constant 0 : index
    %1 = vector.load %arg2[%c0_1, %c0_2] : memref<34x64xf32, #tpu.memory_space<vmem>>, vector<34x64xf32>
    %cst = arith.constant dense<0.000000e+00> : vector<8x64xf32>
    %2 = tpu.matmul %0, %1, %cst {dimension_numbers = #tpu.dot_dimension_numbers<[1], [0], [0], [1], [0, 0, 1, 1], [], []>} : vector<8x34xf32>, vector<34x64xf32>, vector<8x64xf32> -> vector<8x64xf32>
    %c0_3 = arith.constant 0 : index
    %c0_4 = arith.constant 0 : index
    %3 = vector.load %arg3[%c0_3, %c0_4] : memref<1x64xf32, #tpu.memory_space<vmem>>, vector<1x64xf32>
    %4 = vector.broadcast %3 : vector<1x64xf32> to vector<8x64xf32>
    %5 = arith.addf %2, %4 : vector<8x64xf32>
    %cst_5 = arith.constant 0.000000e+00 : f32
    %6 = vector.broadcast %cst_5 : f32 to vector<8x64xf32>
    %7 = arith.maximumf %5, %6 : vector<8x64xf32>
    %c0_6 = arith.constant 0 : index
    %c0_7 = arith.constant 0 : index
    %8 = vector.load %arg4[%c0_6, %c0_7] : memref<64x32xf32, #tpu.memory_space<vmem>>, vector<64x32xf32>
    %cst_8 = arith.constant dense<0.000000e+00> : vector<8x32xf32>
    %9 = tpu.matmul %7, %8, %cst_8 {dimension_numbers = #tpu.dot_dimension_numbers<[1], [0], [0], [1], [0, 0, 1, 1], [], []>} : vector<8x64xf32>, vector<64x32xf32>, vector<8x32xf32> -> vector<8x32xf32>
    %c0_9 = arith.constant 0 : index
    %c0_10 = arith.constant 0 : index
    %10 = vector.load %arg5[%c0_9, %c0_10] : memref<1x32xf32, #tpu.memory_space<vmem>>, vector<1x32xf32>
    %11 = vector.broadcast %10 : vector<1x32xf32> to vector<8x32xf32>
    %12 = arith.addf %9, %11 : vector<8x32xf32>
    %cst_11 = arith.constant 0.000000e+00 : f32
    %13 = vector.broadcast %cst_11 : f32 to vector<8x32xf32>
    %14 = arith.maximumf %12, %13 : vector<8x32xf32>
    %c0_12 = arith.constant 0 : index
    %c0_13 = arith.constant 0 : index
    %15 = vector.load %arg6[%c0_12, %c0_13] : memref<32x2xf32, #tpu.memory_space<vmem>>, vector<32x2xf32>
    %cst_14 = arith.constant dense<0.000000e+00> : vector<8x2xf32>
    %16 = tpu.matmul %14, %15, %cst_14 {dimension_numbers = #tpu.dot_dimension_numbers<[1], [0], [0], [1], [0, 0, 1, 1], [], []>} : vector<8x32xf32>, vector<32x2xf32>, vector<8x2xf32> -> vector<8x2xf32>
    %c0_15 = arith.constant 0 : index
    %c0_16 = arith.constant 0 : index
    %17 = vector.load %arg7[%c0_15, %c0_16] : memref<1x2xf32, #tpu.memory_space<vmem>>, vector<1x2xf32>
    %18 = vector.broadcast %17 : vector<1x2xf32> to vector<8x2xf32>
    %19 = arith.addf %16, %18 : vector<8x2xf32>
    %c0_17 = arith.constant 0 : index
    %c0_18 = arith.constant 0 : index
    %20 = vector.load %arg8[%c0_17, %c0_18] : memref<8x2xf32, #tpu.memory_space<vmem>>, vector<8x2xf32>
    tpu.vector_store %arg8[%c0_17, %c0_18], %19 {strides = array<i32>} : memref<8x2xf32, #tpu.memory_space<vmem>>, vector<8x2xf32>,
    return
  }
  func.func @transform_0(%arg0: i32) -> (i32, i32) {
    %c0_i32 = arith.constant 0 : i32
    %c0_i32_0 = arith.constant 0 : i32
    return %arg0, %c0_i32 : i32, i32
  }
  func.func @transform_1(%arg0: i32) -> (i32, i32) {
    %c0_i32 = arith.constant 0 : i32
    %c0_i32_0 = arith.constant 0 : i32
    %c0_i32_1 = arith.constant 0 : i32
    return %c0_i32, %c0_i32_0 : i32, i32
  }
  func.func @transform_2(%arg0: i32) -> (i32, i32) {
    %c0_i32 = arith.constant 0 : i32
    %c0_i32_0 = arith.constant 0 : i32
    %c0_i32_1 = arith.constant 0 : i32
    return %c0_i32, %c0_i32_0 : i32, i32
  }
  func.func @transform_3(%arg0: i32) -> (i32, i32) {
    %c0_i32 = arith.constant 0 : i32
    %c0_i32_0 = arith.constant 0 : i32
    %c0_i32_1 = arith.constant 0 : i32
    return %c0_i32, %c0_i32_0 : i32, i32
  }
  func.func @transform_4(%arg0: i32) -> (i32, i32) {
    %c0_i32 = arith.constant 0 : i32
    %c0_i32_0 = arith.constant 0 : i32
    %c0_i32_1 = arith.constant 0 : i32
    return %c0_i32, %c0_i32_0 : i32, i32
  }
  func.func @transform_5(%arg0: i32) -> (i32, i32) {
    %c0_i32 = arith.constant 0 : i32
    %c0_i32_0 = arith.constant 0 : i32
    %c0_i32_1 = arith.constant 0 : i32
    return %c0_i32, %c0_i32_0 : i32, i32
  }
  func.func @transform_6(%arg0: i32) -> (i32, i32) {
    %c0_i32 = arith.constant 0 : i32
    %c0_i32_0 = arith.constant 0 : i32
    %c0_i32_1 = arith.constant 0 : i32
    return %c0_i32, %c0_i32_0 : i32, i32
  }
  func.func @transform_7(%arg0: i32) -> (i32, i32) {
    %c0_i32 = arith.constant 0 : i32
    %c0_i32_0 = arith.constant 0 : i32
    return %arg0, %c0_i32 : i32, i32
  }
}

</mosaic_0001>

<llo_original>
// kernel: neural_net_forward.1
$region0: #{neural_net_forward.1}
  #allocation0 [shape = 'u32[]', space=smem, size = 0x4, offset = 0x4, fixed_abs, tag = 'smem constant byte address 0x4 - core index']
  #allocation1 [shape = 'u32[144,128]{1,0:T(1,128)}', space=vmem, size = 0x12000, scoped, tag = 'internal scratch']
  %s0 = inlined_call_operand.vmem [shape: f32[8,34], index: 0, kind: input, shape index: {}]
  %s1 = inlined_call_operand.vmem [shape: f32[34,64], index: 1, kind: input, shape index: {}]
  %s2 = inlined_call_operand.vmem [shape: f32[1,64], index: 2, kind: input, shape index: {}]
  %s3 = inlined_call_operand.vmem [shape: f32[64,32], index: 3, kind: input, shape index: {}]
  %s4 = inlined_call_operand.vmem [shape: f32[1,32], index: 4, kind: input, shape index: {}]
  %s5 = inlined_call_operand.vmem [shape: f32[32,2], index: 5, kind: input, shape index: {}]
  %s6 = inlined_call_operand.vmem [shape: f32[1,2], index: 6, kind: input, shape index: {}]
  %s7 = inlined_call_operand.vmem [shape: f32[8,2], index: 7, kind: output, shape index: {}]
  %s8 = sld [smem:[#allocation0]]
  $region38: #{neural_net_forward.1} parent=0
    _
  %s10 = ssub.s32 1, %s8
  %s11 = scalar_select 0, %s10, %s8
  // Predicated region
  $region2: #{neural_net_forward.1} parent=0 // pred_check
    _
  $region3: #{neural_net_forward.1} parent=0 // pred_check_branch
    %13 = sbr.rel (0) target = $region5
  $region4: #{neural_net_forward.1} parent=0 // pred_region
    _
  $region5: #{neural_net_forward.1} parent=0 // pred_fallthru
    _
  // Predicated region
  $region6: #{neural_net_forward.1} parent=0 // pred_check
    _
  $region7: #{neural_net_forward.1} parent=0 // pred_check_branch
    %15 = sbr.rel (0) target = $region9
  $region8: #{neural_net_forward.1} parent=0 // pred_region
    _
  $region9: #{neural_net_forward.1} parent=0 // pred_fallthru
    _
  // Predicated region
  $region10: #{neural_net_forward.1} parent=0 // pred_check
    _
  $region11: #{neural_net_forward.1} parent=0 // pred_check_branch
    %17 = sbr.rel (0) target = $region13
  $region12: #{neural_net_forward.1} parent=0 // pred_region
    _
  $region13: #{neural_net_forward.1} parent=0 // pred_fallthru
    _
  // Predicated region
  $region14: #{neural_net_forward.1} parent=0 // pred_check
    _
  $region15: #{neural_net_forward.1} parent=0 // pred_check_branch
    %19 = sbr.rel (0) target = $region17
  $region16: #{neural_net_forward.1} parent=0 // pred_region
    _
  $region17: #{neural_net_forward.1} parent=0 // pred_fallthru
    _
  // Predicated region
  $region18: #{neural_net_forward.1} parent=0 // pred_check
    _
  $region19: #{neural_net_forward.1} parent=0 // pred_check_branch
    %21 = sbr.rel (0) target = $region21
  $region20: #{neural_net_forward.1} parent=0 // pred_region
    _
  $region21: #{neural_net_forward.1} parent=0 // pred_fallthru
    _
  // Predicated region
  $region22: #{neural_net_forward.1} parent=0 // pred_check
    _
  $region23: #{neural_net_forward.1} parent=0 // pred_check_branch
    %23 = sbr.rel (0) target = $region25
  $region24: #{neural_net_forward.1} parent=0 // pred_region
    _
  $region25: #{neural_net_forward.1} parent=0 // pred_fallthru
    _
  // Predicated region
  $region26: #{neural_net_forward.1} parent=0 // pred_check
    _
  $region27: #{neural_net_forward.1} parent=0 // pred_check_branch
    %25 = sbr.rel (0) target = $region29
  $region28: #{neural_net_forward.1} parent=0 // pred_region
    _
  $region29: #{neural_net_forward.1} parent=0 // pred_fallthru
    _
  %v26 = vld [vmem:[%s0] sm:$0xff]
  %v27 = vld [vmem:[%s1] sm:$0xff]
  %v28 = vld [vmem:[%s1 + $0x8] sm:$0xff]
  %v29 = vld [vmem:[%s1 + $0x10] sm:$0xff]
  %v30 = vld [vmem:[%s1 + $0x18] sm:$0xff]
  %v31 = vld [vmem:[%s1 + $0x20] sm:$0x3]
  %v32 = vld [vmem:[%s2] sm:$0x1]
  %v34 = vlaneseq
  %v35 = vshrl.u32 %v34, 7
  %v36 = vsub.s32 0, %v35
  %v37 = vrot.slane %v32, %v36
  %vm39 = vcmask 277504
  %v41 = vsel %vm39, %v26, 0
  %vm43 = vcmask 1041408
  %v45 = vsel %vm43, %v31, 0
  %47 = vmatprep.subr.mxu0 0.0
  %48 = vmatpush1.msra.mxu0 %v27
  %49 = vmatprep.subr.mxu0 0.0
  %50 = vmatpush1.msra.mxu0 %v28
  %51 = vmatprep.subr.mxu0 0.0
  %52 = vmatpush1.msra.mxu0 %v29
  %53 = vmatprep.subr.mxu0 0.0
  %54 = vmatpush1.msra.mxu0 %v30
  %55 = vmatprep.subr.mxu0 0.0
  %56 = vmatpush1.msra.mxu0 %v45
  %57 = vmatprep.subr.mxu0 0.0
  %58 = vmatpush1.msra.mxu0 0.0
  %59 = vmatprep.subr.mxu0 0.0
  %60 = vmatpush1.msra.mxu0 0.0
  %61 = vmatprep.subr.mxu0 0.0
  %62 = vmatpush1.msra.mxu0 0.0
  %63 = vmatprep.subr.mxu0 0.0
  %64 = vmatpush1.msra.mxu0 0.0
  %65 = vmatprep.subr.mxu0 0.0
  %66 = vmatpush1.msra.mxu0 0.0
  %67 = vmatprep.subr.mxu0 0.0
  %68 = vmatpush1.msra.mxu0 0.0
  %69 = vmatprep.subr.mxu0 0.0
  %70 = vmatpush1.msra.mxu0 0.0
  %71 = vmatprep.subr.mxu0 0.0
  %72 = vmatpush1.msra.mxu0 0.0
  %73 = vmatprep.subr.mxu0 0.0
  %74 = vmatpush1.msra.mxu0 0.0
  %75 = vmatprep.subr.mxu0 0.0
  %76 = vmatpush1.msra.mxu0 0.0
  %77 = vmatprep.subr.mxu0 0.0
  %78 = vmatpush1.msra.mxu0 0.0
  %79 = vmatprep.subr.mxu0 0.0
  %80 = vmatpush1.msra.mxu0 0.0
  %81 = vmatprep.subr.mxu0 0.0
  %82 = vmatpush1.msra.mxu0 0.0
  %83 = vmatprep.subr.mxu0 0.0
  %84 = vmatpush1.msra.mxu0 0.0
  %85 = vmatprep.subr.mxu0 0.0
  %86 = vmatpush1.msra.mxu0 0.0
  %87 = vmatprep.subr.mxu0 0.0
  %88 = vmatpush1.msra.mxu0 0.0
  %89 = vmatprep.subr.mxu0 0.0
  %90 = vmatpush1.msra.mxu0 0.0
  %91 = vmatprep.subr.mxu0 0.0
  %92 = vmatpush1.msra.mxu0 0.0
  %93 = vmatprep.subr.mxu0 0.0
  %94 = vmatpush1.msra.mxu0 0.0
  %95 = vmatprep.subr.mxu0 0.0
  %96 = vmatpush1.msra.mxu0 0.0
  %97 = vmatprep.subr.mxu0 0.0
  %98 = vmatpush1.msra.mxu0 0.0
  %99 = vmatprep.subr.mxu0 0.0
  %100 = vmatpush1.msra.mxu0 0.0
  %101 = vmatprep.subr.mxu0 0.0
  %102 = vmatpush1.msra.mxu0 0.0
  %103 = vmatprep.subr.mxu0 0.0
  %104 = vmatpush1.msra.mxu0 0.0
  %105 = vmatprep.subr.mxu0 0.0
  %106 = vmatpush1.msra.mxu0 0.0
  %107 = vmatprep.subr.mxu0 0.0
  %108 = vmatpush1.msra.mxu0 0.0
  %109 = vmatprep.subr.mxu0 0.0
  %110 = vmatpush1.msra.mxu0 0.0
  %111 = vmatprep.mubr.f32.mxu0 0.0
  %112 = vmatmul.mubr.f32.gmra.mrb[0].mxu0 %v41
  %v113 = vpop.f32.mrb[0].mxu0
  %v114 = vadd.f32 %v37, %v113
  %v115 = vpop.f32.mrb[0].mxu0
  %116 = vdwg.mxu0
  %v117 = vmax.f32 %v114, 0.0
  %v118 = vld [vmem:[%s3] sm:$0xff]
  %v119 = vld [vmem:[%s3 + $0x8] sm:$0xff]
  %v120 = vld [vmem:[%s3 + $0x10] sm:$0xff]
  %v121 = vld [vmem:[%s3 + $0x18] sm:$0xff]
  %v122 = vld [vmem:[%s3 + $0x20] sm:$0xff]
  %v123 = vld [vmem:[%s3 + $0x28] sm:$0xff]
  %v124 = vld [vmem:[%s3 + $0x30] sm:$0xff]
  %v125 = vld [vmem:[%s3 + $0x38] sm:$0xff]
  %v126 = vld [vmem:[%s4] sm:$0x1]
  %v128 = vlaneseq
  %v129 = vshrl.u32 %v128, 7
  %v130 = vsub.s32 0, %v129
  %v131 = vrot.slane %v126, %v130
  %vm133 = vcmask 523264
  %v135 = vsel %vm133, %v117, 0
  %137 = vmatprep.subr.mxu0 0.0
  %138 = vmatpush1.msra.mxu0 %v118
  %139 = vmatprep.subr.mxu0 0.0
  %140 = vmatpush1.msra.mxu0 %v119
  %141 = vmatprep.subr.mxu0 0.0
  %142 = vmatpush1.msra.mxu0 %v120
  %143 = vmatprep.subr.mxu0 0.0
  %144 = vmatpush1.msra.mxu0 %v121
  %145 = vmatprep.subr.mxu0 0.0
  %146 = vmatpush1.msra.mxu0 %v122
  %147 = vmatprep.subr.mxu0 0.0
  %148 = vmatpush1.msra.mxu0 %v123
  %149 = vmatprep.subr.mxu0 0.0
  %150 = vmatpush1.msra.mxu0 %v124
  %151 = vmatprep.subr.mxu0 0.0
  %152 = vmatpush1.msra.mxu0 %v125
  %153 = vmatprep.subr.mxu0 0.0
  %154 = vmatpush1.msra.mxu0 0.0
  %155 = vmatprep.subr.mxu0 0.0
  %156 = vmatpush1.msra.mxu0 0.0
  %157 = vmatprep.subr.mxu0 0.0
  %158 = vmatpush1.msra.mxu0 0.0
  %159 = vmatprep.subr.mxu0 0.0
  %160 = vmatpush1.msra.mxu0 0.0
  %161 = vmatprep.subr.mxu0 0.0
  %162 = vmatpush1.msra.mxu0 0.0
  %163 = vmatprep.subr.mxu0 0.0
  %164 = vmatpush1.msra.mxu0 0.0
  %165 = vmatprep.subr.mxu0 0.0
  %166 = vmatpush1.msra.mxu0 0.0
  %167 = vmatprep.subr.mxu0 0.0
  %168 = vmatpush1.msra.mxu0 0.0
  %169 = vmatprep.subr.mxu0 0.0
  %170 = vmatpush1.msra.mxu0 0.0
  %171 = vmatprep.subr.mxu0 0.0
  %172 = vmatpush1.msra.mxu0 0.0
  %173 = vmatprep.subr.mxu0 0.0
  %174 = vmatpush1.msra.mxu0 0.0
  %175 = vmatprep.subr.mxu0 0.0
  %176 = vmatpush1.msra.mxu0 0.0
  %177 = vmatprep.subr.mxu0 0.0
  %178 = vmatpush1.msra.mxu0 0.0
  %179 = vmatprep.subr.mxu0 0.0
  %180 = vmatpush1.msra.mxu0 0.0
  %181 = vmatprep.subr.mxu0 0.0
  %182 = vmatpush1.msra.mxu0 0.0
  %183 = vmatprep.subr.mxu0 0.0
  %184 = vmatpush1.msra.mxu0 0.0
  %185 = vmatprep.subr.mxu0 0.0
  %186 = vmatpush1.msra.mxu0 0.0
  %187 = vmatprep.subr.mxu0 0.0
  %188 = vmatpush1.msra.mxu0 0.0
  %189 = vmatprep.subr.mxu0 0.0
  %190 = vmatpush1.msra.mxu0 0.0
  %191 = vmatprep.subr.mxu0 0.0
  %192 = vmatpush1.msra.mxu0 0.0
  %193 = vmatprep.subr.mxu0 0.0
  %194 = vmatpush1.msra.mxu0 0.0
  %195 = vmatprep.subr.mxu0 0.0
  %196 = vmatpush1.msra.mxu0 0.0
  %197 = vmatprep.subr.mxu0 0.0
  %198 = vmatpush1.msra.mxu0 0.0
  %199 = vmatprep.subr.mxu0 0.0
  %200 = vmatpush1.msra.mxu0 0.0
  %201 = vmatprep.mubr.f32.mxu0 0.0
  %202 = vmatmul.mubr.f32.gmra.mrb[0].mxu0 %v135
  %v203 = vpop.f32.mrb[0].mxu0
  %v204 = vadd.f32 %v131, %v203
  %v205 = vpop.f32.mrb[0].mxu0
  %206 = vdwg.mxu0
  %v207 = vmax.f32 %v204, 0.0
  %v208 = vld [vmem:[%s5] sm:$0xff]
  %v209 = vld [vmem:[%s5 + $0x8] sm:$0xff]
  %v210 = vld [vmem:[%s5 + $0x10] sm:$0xff]
  %v211 = vld [vmem:[%s5 + $0x18] sm:$0xff]
  %v212 = vld [vmem:[%s6] sm:$0x1]
  %v214 = vlaneseq
  %v215 = vshrl.u32 %v214, 7
  %v216 = vsub.s32 0, %v215
  %v217 = vrot.slane %v212, %v216
  %vm219 = vcmask 261120
  %v221 = vsel %vm219, %v207, 0
  %223 = vmatprep.subr.mxu0 0.0
  %224 = vmatpush1.msra.mxu0 %v208
  %225 = vmatprep.subr.mxu0 0.0
  %226 = vmatpush1.msra.mxu0 %v209
  %227 = vmatprep.subr.mxu0 0.0
  %228 = vmatpush1.msra.mxu0 %v210
  %229 = vmatprep.subr.mxu0 0.0
  %230 = vmatpush1.msra.mxu0 %v211
  %231 = vmatprep.subr.mxu0 0.0
  %232 = vmatpush1.msra.mxu0 0.0
  %233 = vmatprep.subr.mxu0 0.0
  %234 = vmatpush1.msra.mxu0 0.0
  %235 = vmatprep.subr.mxu0 0.0
  %236 = vmatpush1.msra.mxu0 0.0
  %237 = vmatprep.subr.mxu0 0.0
  %238 = vmatpush1.msra.mxu0 0.0
  %239 = vmatprep.subr.mxu0 0.0
  %240 = vmatpush1.msra.mxu0 0.0
  %241 = vmatprep.subr.mxu0 0.0
  %242 = vmatpush1.msra.mxu0 0.0
  %243 = vmatprep.subr.mxu0 0.0
  %244 = vmatpush1.msra.mxu0 0.0
  %245 = vmatprep.subr.mxu0 0.0
  %246 = vmatpush1.msra.mxu0 0.0
  %247 = vmatprep.subr.mxu0 0.0
  %248 = vmatpush1.msra.mxu0 0.0
  %249 = vmatprep.subr.mxu0 0.0
  %250 = vmatpush1.msra.mxu0 0.0
  %251 = vmatprep.subr.mxu0 0.0
  %252 = vmatpush1.msra.mxu0 0.0
  %253 = vmatprep.subr.mxu0 0.0
  %254 = vmatpush1.msra.mxu0 0.0
  %255 = vmatprep.subr.mxu0 0.0
  %256 = vmatpush1.msra.mxu0 0.0
  %257 = vmatprep.subr.mxu0 0.0
  %258 = vmatpush1.msra.mxu0 0.0
  %259 = vmatprep.subr.mxu0 0.0
  %260 = vmatpush1.msra.mxu0 0.0
  %261 = vmatprep.subr.mxu0 0.0
  %262 = vmatpush1.msra.mxu0 0.0
  %263 = vmatprep.subr.mxu0 0.0
  %264 = vmatpush1.msra.mxu0 0.0
  %265 = vmatprep.subr.mxu0 0.0
  %266 = vmatpush1.msra.mxu0 0.0
  %267 = vmatprep.subr.mxu0 0.0
  %268 = vmatpush1.msra.mxu0 0.0
  %269 = vmatprep.subr.mxu0 0.0
  %270 = vmatpush1.msra.mxu0 0.0
  %271 = vmatprep.subr.mxu0 0.0
  %272 = vmatpush1.msra.mxu0 0.0
  %273 = vmatprep.subr.mxu0 0.0
  %274 = vmatpush1.msra.mxu0 0.0
  %275 = vmatprep.subr.mxu0 0.0
  %276 = vmatpush1.msra.mxu0 0.0
  %277 = vmatprep.subr.mxu0 0.0
  %278 = vmatpush1.msra.mxu0 0.0
  %279 = vmatprep.subr.mxu0 0.0
  %280 = vmatpush1.msra.mxu0 0.0
  %281 = vmatprep.subr.mxu0 0.0
  %282 = vmatpush1.msra.mxu0 0.0
  %283 = vmatprep.subr.mxu0 0.0
  %284 = vmatpush1.msra.mxu0 0.0
  %285 = vmatprep.subr.mxu0 0.0
  %286 = vmatpush1.msra.mxu0 0.0
  %287 = vmatprep.mubr.f32.mxu0 0.0
  %288 = vmatmul.mubr.f32.gmra.mrb[0].mxu0 %v221
  %v289 = vpop.f32.mrb[0].mxu0
  %v290 = vadd.f32 %v217, %v289
  %v291 = vpop.f32.mrb[0].mxu0
  %292 = vdwg.mxu0
  %vm293 = vcmask 15360
  %294 = vst.msk [vmem:[%s7] sm:$0xff] %vm293, %v290
  // Predicated region
  $region30: #{neural_net_forward.1} parent=0 // pred_check
    _
  $region31: #{neural_net_forward.1} parent=0 // pred_check_branch
    %296 = sbr.rel (0) target = $region33
  $region32: #{neural_net_forward.1} parent=0 // pred_region
    _
  $region33: #{neural_net_forward.1} parent=0 // pred_fallthru
    _
  // Predicated region
  $region34: #{neural_net_forward.1} parent=0 // pred_check
    _
  $region35: #{neural_net_forward.1} parent=0 // pred_check_branch
    %298 = sbr.rel (0) target = $region37
  $region36: #{neural_net_forward.1} parent=0 // pred_region
    _
  $region37: #{neural_net_forward.1} parent=0 // pred_fallthru
    _

</llo_original>
